<compile_context>
chip_gen: v7x
topology: tpu7x:2x2x1
jax: 0.10.0
libtpu: 0.0.40
codegen_flags: <defaults>
</compile_context>

<pallas_src>
import jax
import jax.numpy as jnp
from jax import lax
from jax.experimental import pallas as pl
from jax.experimental.pallas import tpu as pltpu

LAYER_NORM_EPS = 1e-12


def _vision_encoder_kernel(x_ref, w_ref, c_ref, out_ref):
    # ---- vis_fc: Linear(feat_dim -> hidden).  MXU in bf16, f32 accumulation. ----
    x = x_ref[...]
    if x.dtype != jnp.bfloat16:          # fallback cast; prefer bf16 from upstream
        x = x.astype(jnp.bfloat16)
    w = w_ref[...]
    if w.dtype != jnp.bfloat16:          # prepare_params() already stores bf16
        w = w.astype(jnp.bfloat16)
    h = jnp.dot(x, w, preferred_element_type=jnp.float32)

    c = c_ref[...].astype(jnp.float32)   # (3, H): row 0 = bias, 1 = gamma, 2 = beta
    h = h + c[0:1, :]                    # bias BEFORE LayerNorm (shifts mean/var)

    # ---- visn_layer_norm over the hidden dim (f32 math). ----
    mean = jnp.mean(h, axis=-1, keepdims=True)
    centered = h - mean
    var = jnp.mean(centered * centered, axis=-1, keepdims=True)
    h = centered * lax.rsqrt(var + LAYER_NORM_EPS)
    h = h * c[1:2, :] + c[2:3, :]

    # ---- dropout: identity at inference.
    # TODO(synk): training-mode dropout (pltpu.prng_seed + stateful_bernoulli) if needed.
    out_ref[...] = h.astype(out_ref.dtype)


def _pick_row_block(n_rows, max_block=512):
    """Large tiles amortize per-step overhead; >=2 blocks keep both v7x TCs busy."""
    half = pl.cdiv(n_rows, 2)
    rb = ((half + 7) // 8) * 8           # round up to a sublane multiple of 8
    return max(8, min(max_block, rb))


def _vmem_limit_bytes():
    try:
        cap = pltpu.get_tpu_info().vmem_capacity_bytes  # generation-aware (64 MiB/TC on v7x)
    except Exception:
        cap = 64 * 1024 * 1024                          # conservative fallback
    return int(cap * 3 // 4)


def vision_encoder(visn_input, params, *, row_block=None, out_dtype=None):
    """visn_input: [N, F] f32 or bf16 (flattened batch*regions).  Returns [N, H]."""
    w = params["vis_fc_w"]        # [F, H], bf16 (prepared once, no per-call cast)
    consts = params["ln_consts"]  # [3, H], f32: bias / gamma / beta packed
    N, F = visn_input.shape
    H = w.shape[1]
    if out_dtype is None:
        out_dtype = visn_input.dtype   # pass jnp.bfloat16 if the downstream consumes bf16
    if row_block is None:
        row_block = _pick_row_block(N)
    n_blocks = pl.cdiv(N, row_block)   # partial last block handled by masked output stores

    # TODO(synk): if F*H*2 bytes ever approaches ~1/3 of v7x VMEM, add a K (F) grid
    # axis ('arbitrary', last) with an f32 accumulator scratch and pl.when finalize.

    def _build(single_buffer_consts):
        const_kwargs = (
            dict(pipeline_mode=pl.Buffered(1)) if single_buffer_consts else {}
        )
        return pl.pallas_call(
            _vision_encoder_kernel,
            out_shape=jax.ShapeDtypeStruct((N, H), out_dtype),
            grid_spec=pltpu.PrefetchScalarGridSpec(
                num_scalar_prefetch=0,
                grid=(n_blocks,),
                in_specs=[
                    pl.BlockSpec((row_block, F), lambda i: (i, 0)),          # x row tile
                    pl.BlockSpec((F, H), lambda i: (0, 0), **const_kwargs),  # weight (bf16)
                    pl.BlockSpec((3, H), lambda i: (0, 0), **const_kwargs),  # bias/gamma/beta
                ],
                out_specs=pl.BlockSpec((row_block, H), lambda i: (i, 0)),    # lane-dense H
            ),
            compiler_params=pltpu.CompilerParams(
                dimension_semantics=("parallel",),   # shard row blocks across v7x's 2 TCs
                vmem_limit_bytes=_vmem_limit_bytes(),
            ),
        )

    try:
        # Single-buffer the constant operands (their block index never changes):
        # halves the weight's VMEM residency, which matters on v7x's 64 MiB VMEM.
        out = _build(single_buffer_consts=True)(visn_input, w, consts)
        return jax.block_until_ready(out)   # surface any lowering issue here for the fallback
    except Exception:
        # Older / stricter JAX builds: fall back to default double-buffering.
        return _build(single_buffer_consts=False)(visn_input, w, consts)


def init_params(key, feat_dim, hidden_size):
    """f32 parameters matching the PyTorch module (weight pre-transposed to [in, out])."""
    k1, k2, k3, k4 = jax.random.split(key, 4)
    scale = 0.02
    return {
        "vis_fc_w": scale * jax.random.normal(k1, (feat_dim, hidden_size), jnp.float32),
        "vis_fc_b": scale * jax.random.normal(k2, (hidden_size,), jnp.float32),
        "ln_gamma": 1.0 + 0.1 * jax.random.normal(k3, (hidden_size,), jnp.float32),
        "ln_beta": 0.1 * jax.random.normal(k4, (hidden_size,), jnp.float32),
    }


def prepare_params(params_f32):
    """One-time conversion to the kernel-ready layout (do NOT call per step):
       * weight cast to bf16 once (no per-call cast / extra HBM pass),
       * bias, LN gamma, LN beta packed into a single (3, H) f32 array (one DMA)."""
    return {
        "vis_fc_w": params_f32["vis_fc_w"].astype(jnp.bfloat16),
        "ln_consts": jnp.stack(
            [params_f32["vis_fc_b"], params_f32["ln_gamma"], params_f32["ln_beta"]],
            axis=0,
        ),
    }


def _reference(x, p_f32):
    """Pure-JAX f32 reference matching the PyTorch forward (dropout = identity)."""
    h = x @ p_f32["vis_fc_w"] + p_f32["vis_fc_b"]
    mean = jnp.mean(h, axis=-1, keepdims=True)
    var = jnp.mean((h - mean) ** 2, axis=-1, keepdims=True)
    h = (h - mean) / jnp.sqrt(var + LAYER_NORM_EPS)
    return h * p_f32["ln_gamma"] + p_f32["ln_beta"]


if __name__ == "__main__":
    # Small shapes consistent with the module.  regions=9 makes N=18 ragged so the
    # masked partial-last-block path (no wrapper padding) is actually exercised.
    batch, regions, feat_dim, hidden = 2, 9, 256, 128

    key = jax.random.PRNGKey(0)
    kx, kp = jax.random.split(key)
    params_f32 = init_params(kp, feat_dim, hidden)
    params = prepare_params(params_f32)        # one-time bf16 weight + packed constants

    visn_input = jax.random.normal(kx, (batch, regions, feat_dim), jnp.float32)
    x2d = visn_input.reshape(batch * regions, feat_dim)

    out = vision_encoder(x2d, params)          # N=18 -> row_block=16 -> 2 blocks (1 partial)
    out = jax.block_until_ready(out)
    out3d = out.reshape(batch, regions, hidden)

    ref = _reference(x2d, params_f32).reshape(batch, regions, hidden)
    assert out3d.shape == (batch, regions, hidden)
    # bf16 MXU inputs (f32 accumulation) vs f32 reference -> loosened tolerance.
    err = float(jnp.max(jnp.abs(out3d - ref)))
    assert jnp.allclose(out3d, ref, atol=5e-2, rtol=5e-2), err

    print("KERNEL_OK")
</pallas_src>

<mosaic_0001>
module attributes {stable_mosaic.version = 11 : i64} {
  func.func @_vision_encoder_kernel(%arg0: i32, %arg1: memref<16x256xf32, #tpu.memory_space<vmem>>, %arg2: memref<256x128xbf16, #tpu.memory_space<vmem>>, %arg3: memref<3x128xf32, #tpu.memory_space<vmem>>, %arg4: memref<16x128xf32, #tpu.memory_space<vmem>>) attributes {dimension_semantics = [#tpu.dimension_semantics<parallel>], iteration_bounds = array<i64: 2>, scalar_prefetch = 0 : i64, scratch_operands = 0 : i64, tpu.core_type = #tpu.core_type<tc>, window_params = [{transform_indices = @transform_0, window_bounds = array<i64: 16, 256>}, {pipeline_mode = #tpu.pipeline_mode<synchronous>, transform_indices = @transform_1, window_bounds = array<i64: 256, 128>}, {pipeline_mode = #tpu.pipeline_mode<synchronous>, transform_indices = @transform_2, window_bounds = array<i64: 3, 128>}, {transform_indices = @transform_3, window_bounds = array<i64: 16, 128>}]} {
    %c0 = arith.constant 0 : index
    %c0_0 = arith.constant 0 : index
    %0 = vector.load %arg1[%c0, %c0_0] : memref<16x256xf32, #tpu.memory_space<vmem>>, vector<16x256xf32>
    %1 = arith.truncf %0 : vector<16x256xf32> to vector<16x256xbf16>
    %c0_1 = arith.constant 0 : index
    %c0_2 = arith.constant 0 : index
    %2 = vector.load %arg2[%c0_1, %c0_2] : memref<256x128xbf16, #tpu.memory_space<vmem>>, vector<256x128xbf16>
    %cst = arith.constant dense<0.000000e+00> : vector<16x128xf32>
    %3 = tpu.matmul %1, %2, %cst {dimension_numbers = #tpu.dot_dimension_numbers<[1], [0], [0], [1], [0, 0, 1, 1], [], []>} : vector<16x256xbf16>, vector<256x128xbf16>, vector<16x128xf32> -> vector<16x128xf32>
    %c0_3 = arith.constant 0 : index
    %c0_4 = arith.constant 0 : index
    %4 = vector.load %arg3[%c0_3, %c0_4] : memref<3x128xf32, #tpu.memory_space<vmem>>, vector<3x128xf32>
    %5 = vector.extract_strided_slice %4 {offsets = [0, 0], sizes = [1, 128], strides = [1, 1]} : vector<3x128xf32> to vector<1x128xf32>
    %6 = vector.broadcast %5 : vector<1x128xf32> to vector<16x128xf32>
    %7 = arith.addf %3, %6 : vector<16x128xf32>
    %cst_5 = arith.constant dense<0.000000e+00> : vector<16xf32>
    %8 = vector.multi_reduction <add>, %7, %cst_5 [1] : vector<16x128xf32> to vector<16xf32>
    %9 = vector.shape_cast %8 : vector<16xf32> to vector<16x1xf32>
    %cst_6 = arith.constant 1.280000e+02 : f32
    %10 = vector.broadcast %cst_6 : f32 to vector<16x1xf32>
    %11 = arith.divf %9, %10 : vector<16x1xf32>
    %12 = vector.broadcast %11 : vector<16x1xf32> to vector<16x128xf32>
    %13 = arith.subf %7, %12 : vector<16x128xf32>
    %14 = arith.mulf %13, %13 : vector<16x128xf32>
    %cst_7 = arith.constant dense<0.000000e+00> : vector<16xf32>
    %15 = vector.multi_reduction <add>, %14, %cst_7 [1] : vector<16x128xf32> to vector<16xf32>
    %16 = vector.shape_cast %15 : vector<16xf32> to vector<16x1xf32>
    %cst_8 = arith.constant 1.280000e+02 : f32
    %17 = vector.broadcast %cst_8 : f32 to vector<16x1xf32>
    %18 = arith.divf %16, %17 : vector<16x1xf32>
    %cst_9 = arith.constant 9.99999996E-13 : f32
    %19 = vector.broadcast %cst_9 : f32 to vector<16x1xf32>
    %20 = arith.addf %18, %19 : vector<16x1xf32>
    %21 = math.rsqrt %20 : vector<16x1xf32>
    %22 = vector.broadcast %21 : vector<16x1xf32> to vector<16x128xf32>
    %23 = arith.mulf %13, %22 : vector<16x128xf32>
    %24 = vector.extract_strided_slice %4 {offsets = [1, 0], sizes = [1, 128], strides = [1, 1]} : vector<3x128xf32> to vector<1x128xf32>
    %25 = vector.broadcast %24 : vector<1x128xf32> to vector<16x128xf32>
    %26 = arith.mulf %23, %25 : vector<16x128xf32>
    %27 = vector.extract_strided_slice %4 {offsets = [2, 0], sizes = [1, 128], strides = [1, 1]} : vector<3x128xf32> to vector<1x128xf32>
    %28 = vector.broadcast %27 : vector<1x128xf32> to vector<16x128xf32>
    %29 = arith.addf %26, %28 : vector<16x128xf32>
    %c0_10 = arith.constant 0 : index
    %c0_11 = arith.constant 0 : index
    %30 = vector.load %arg4[%c0_10, %c0_11] : memref<16x128xf32, #tpu.memory_space<vmem>>, vector<16x128xf32>
    tpu.vector_store %arg4[%c0_10, %c0_11], %29 {strides = array<i32>} : memref<16x128xf32, #tpu.memory_space<vmem>>, vector<16x128xf32>,
    return
  }
  func.func @transform_0(%arg0: i32) -> (i32, i32) {
    %c0_i32 = arith.constant 0 : i32
    %c0_i32_0 = arith.constant 0 : i32
    return %arg0, %c0_i32 : i32, i32
  }
  func.func @transform_1(%arg0: i32) -> (i32, i32) {
    %c0_i32 = arith.constant 0 : i32
    %c0_i32_0 = arith.constant 0 : i32
    %c0_i32_1 = arith.constant 0 : i32
    return %c0_i32, %c0_i32_0 : i32, i32
  }
  func.func @transform_2(%arg0: i32) -> (i32, i32) {
    %c0_i32 = arith.constant 0 : i32
    %c0_i32_0 = arith.constant 0 : i32
    %c0_i32_1 = arith.constant 0 : i32
    return %c0_i32, %c0_i32_0 : i32, i32
  }
  func.func @transform_3(%arg0: i32) -> (i32, i32) {
    %c0_i32 = arith.constant 0 : i32
    %c0_i32_0 = arith.constant 0 : i32
    return %arg0, %c0_i32 : i32, i32
  }
}

module attributes {stable_mosaic.version = 11 : i64} {
  func.func @_vision_encoder_kernel(%arg0: i32, %arg1: memref<16x256xf32, #tpu.memory_space<vmem>>, %arg2: memref<256x128xbf16, #tpu.memory_space<vmem>>, %arg3: memref<3x128xf32, #tpu.memory_space<vmem>>, %arg4: memref<16x128xf32, #tpu.memory_space<vmem>>) attributes {dimension_semantics = [#tpu.dimension_semantics<parallel>], iteration_bounds = array<i64: 2>, scalar_prefetch = 0 : i64, scratch_operands = 0 : i64, tpu.core_type = #tpu.core_type<tc>, window_params = [{transform_indices = @transform_0, window_bounds = array<i64: 16, 256>}, {pipeline_mode = #tpu.pipeline_mode<synchronous>, transform_indices = @transform_1, window_bounds = array<i64: 256, 128>}, {pipeline_mode = #tpu.pipeline_mode<synchronous>, transform_indices = @transform_2, window_bounds = array<i64: 3, 128>}, {transform_indices = @transform_3, window_bounds = array<i64: 16, 128>}]} {
    %c0 = arith.constant 0 : index
    %c0_0 = arith.constant 0 : index
    %0 = vector.load %arg1[%c0, %c0_0] : memref<16x256xf32, #tpu.memory_space<vmem>>, vector<16x256xf32>
    %1 = arith.truncf %0 : vector<16x256xf32> to vector<16x256xbf16>
    %c0_1 = arith.constant 0 : index
    %c0_2 = arith.constant 0 : index
    %2 = vector.load %arg2[%c0_1, %c0_2] : memref<256x128xbf16, #tpu.memory_space<vmem>>, vector<256x128xbf16>
    %cst = arith.constant dense<0.000000e+00> : vector<16x128xf32>
    %3 = tpu.matmul %1, %2, %cst {dimension_numbers = #tpu.dot_dimension_numbers<[1], [0], [0], [1], [0, 0, 1, 1], [], []>} : vector<16x256xbf16>, vector<256x128xbf16>, vector<16x128xf32> -> vector<16x128xf32>
    %c0_3 = arith.constant 0 : index
    %c0_4 = arith.constant 0 : index
    %4 = vector.load %arg3[%c0_3, %c0_4] : memref<3x128xf32, #tpu.memory_space<vmem>>, vector<3x128xf32>
    %5 = vector.extract_strided_slice %4 {offsets = [0, 0], sizes = [1, 128], strides = [1, 1]} : vector<3x128xf32> to vector<1x128xf32>
    %6 = vector.broadcast %5 : vector<1x128xf32> to vector<16x128xf32>
    %7 = arith.addf %3, %6 : vector<16x128xf32>
    %cst_5 = arith.constant dense<0.000000e+00> : vector<16xf32>
    %8 = vector.multi_reduction <add>, %7, %cst_5 [1] : vector<16x128xf32> to vector<16xf32>
    %9 = vector.shape_cast %8 : vector<16xf32> to vector<16x1xf32>
    %cst_6 = arith.constant 1.280000e+02 : f32
    %10 = vector.broadcast %cst_6 : f32 to vector<16x1xf32>
    %11 = arith.divf %9, %10 : vector<16x1xf32>
    %12 = vector.broadcast %11 : vector<16x1xf32> to vector<16x128xf32>
    %13 = arith.subf %7, %12 : vector<16x128xf32>
    %14 = arith.mulf %13, %13 : vector<16x128xf32>
    %cst_7 = arith.constant dense<0.000000e+00> : vector<16xf32>
    %15 = vector.multi_reduction <add>, %14, %cst_7 [1] : vector<16x128xf32> to vector<16xf32>
    %16 = vector.shape_cast %15 : vector<16xf32> to vector<16x1xf32>
    %cst_8 = arith.constant 1.280000e+02 : f32
    %17 = vector.broadcast %cst_8 : f32 to vector<16x1xf32>
    %18 = arith.divf %16, %17 : vector<16x1xf32>
    %cst_9 = arith.constant 9.99999996E-13 : f32
    %19 = vector.broadcast %cst_9 : f32 to vector<16x1xf32>
    %20 = arith.addf %18, %19 : vector<16x1xf32>
    %21 = math.rsqrt %20 : vector<16x1xf32>
    %22 = vector.broadcast %21 : vector<16x1xf32> to vector<16x128xf32>
    %23 = arith.mulf %13, %22 : vector<16x128xf32>
    %24 = vector.extract_strided_slice %4 {offsets = [1, 0], sizes = [1, 128], strides = [1, 1]} : vector<3x128xf32> to vector<1x128xf32>
    %25 = vector.broadcast %24 : vector<1x128xf32> to vector<16x128xf32>
    %26 = arith.mulf %23, %25 : vector<16x128xf32>
    %27 = vector.extract_strided_slice %4 {offsets = [2, 0], sizes = [1, 128], strides = [1, 1]} : vector<3x128xf32> to vector<1x128xf32>
    %28 = vector.broadcast %27 : vector<1x128xf32> to vector<16x128xf32>
    %29 = arith.addf %26, %28 : vector<16x128xf32>
    %c0_10 = arith.constant 0 : index
    %c0_11 = arith.constant 0 : index
    %30 = vector.load %arg4[%c0_10, %c0_11] : memref<16x128xf32, #tpu.memory_space<vmem>>, vector<16x128xf32>
    tpu.vector_store %arg4[%c0_10, %c0_11], %29 {strides = array<i32>} : memref<16x128xf32, #tpu.memory_space<vmem>>, vector<16x128xf32>,
    return
  }
  func.func @transform_0(%arg0: i32) -> (i32, i32) {
    %c0_i32 = arith.constant 0 : i32
    %c0_i32_0 = arith.constant 0 : i32
    return %arg0, %c0_i32 : i32, i32
  }
  func.func @transform_1(%arg0: i32) -> (i32, i32) {
    %c0_i32 = arith.constant 0 : i32
    %c0_i32_0 = arith.constant 0 : i32
    %c0_i32_1 = arith.constant 0 : i32
    return %c0_i32, %c0_i32_0 : i32, i32
  }
  func.func @transform_2(%arg0: i32) -> (i32, i32) {
    %c0_i32 = arith.constant 0 : i32
    %c0_i32_0 = arith.constant 0 : i32
    %c0_i32_1 = arith.constant 0 : i32
    return %c0_i32, %c0_i32_0 : i32, i32
  }
  func.func @transform_3(%arg0: i32) -> (i32, i32) {
    %c0_i32 = arith.constant 0 : i32
    %c0_i32_0 = arith.constant 0 : i32
    return %arg0, %c0_i32 : i32, i32
  }
}

</mosaic_0001>

<llo_original>
// kernel: tpu_custom_call.1
$region0: #{tpu_custom_call.1}
  #allocation0 [shape = 'u32[]', space=smem, size = 0x4, offset = 0x4, fixed_abs, tag = 'smem constant byte address 0x4 - core index']
  #allocation1 [shape = 'u32[144,128]{1,0:T(1,128)}', space=vmem, size = 0x12000, scoped, tag = 'internal scratch']
  %s0 = inlined_call_operand.hbm [shape: f32[18,256], index: 0, kind: input, shape index: {}]
  %s1 = inlined_call_operand.hbm [shape: bf16[256,128], index: 1, kind: input, shape index: {}]
  %s2 = inlined_call_operand.vmem [shape: f32[3,128], index: 2, kind: input, shape index: {}]
  %s3 = inlined_call_operand.hbm [shape: f32[18,128], index: 3, kind: output, shape index: {}]
  %s4 = sld [smem:[#allocation0]]
  $region53: #{tpu_custom_call.1} parent=0
    _
  %s6 = ssub.s32 1, %s4
  %s7 = scalar_select 0, %s6, %s4
  $region1: #{tpu_custom_call.1} parent=0
    #allocation2 [shape = 'u8[32768]{0}', space=vmem, size = 0x8000, scoped, tag = 'input window, operand 0']
    #allocation3 [shape = 's32[2]{0}', space=sflag, size = 0x8, scoped, tag = 'scoped memory for tpu_custom_call.1']
    #allocation4 [shape = 's32[2]{0}', space=sflag, size = 0x8, scoped, tag = 'scoped memory for tpu_custom_call.1']
    #allocation5 [shape = 'u8[65536]{0}', space=vmem, size = 0x10000, scoped, tag = 'input window, operand 1, single buffered']
    #allocation6 [shape = 's32[1]{0}', space=sflag, size = 0x4, scoped, tag = 'scoped memory for tpu_custom_call.1']
    #allocation7 [shape = 'u8[16384]{0}', space=vmem, size = 0x4000, scoped, tag = 'output window, operand 0']
    %8 = vsyncpa [#allocation3], 0
    %s9 = scalar_lea.sflag [#allocation3], 1
    %10 = vsyncpa %s9, 0
    %11 = vsyncpa [#allocation6], 0
    %12 = vsyncpa [#allocation4], 0
    %s13 = scalar_lea.sflag [#allocation4], 1
    %14 = vsyncpa %s13, 0
    loop: start=0, step=1, limit=4
    $region2: #{tpu_custom_call.1} parent=1 // loop_pre_header
      _
    $region3: #{tpu_custom_call.1} parent=1 // loop_header
      %s16 = sphi 0, %s20
      %p17 = scmp.ge.s32.totalorder %s16, 4
      %s26 = sphi 0, %s28
      %s29 = sphi 0, %s26
      %s30 = sphi 0, %s29
      %s46 = sphi 0, %s30
      %s50 = sphi 0, %s50
      %s52 = sphi 0, %s50
      %s53 = sphi 0, %s52
      %s67 = sphi 0, %s53
      %s71 = sphi 0, %s71
      %s73 = sphi 0, %s71
      %s74 = sphi 0, %s73
      %s88 = sphi 0, %s74
      %s94 = sphi 0, %s96
      %s97 = sphi 0, %s94
      %s98 = sphi 0, %s97
      %s114 = sphi 0, %s98
    $region4: #{tpu_custom_call.1} parent=1 // loop_header_branch
      %19 = sbr.rel (%p17) target = $region8
    $region5: #{tpu_custom_call.1} parent=1 // loop_body
      %s21 = ssub.s32 %s16, 1
      %s22 = ssub.s32 %s16, 2
      %s23 = sadd.s32 %s16, 1
      %s24 = ssub.s32 %s16, %s23
      %p25 = scmp.eq.s32.totalorder %s24, 0
      %s27 = sadd.s32 %s26, 1
      %s28 = scalar_select %p25, %s26, %s27
      %p31 = pneg %p25
      %p32 = scmp.eq.s32.totalorder %s16, 1
      %p33 = por %p31, %p32
      %p34 = scmp.ne.s32.totalorder %s26, %s29
      %p35 = scmp.eq.s32.totalorder %s16, 0
      %p36 = por %p34, %p35
      %p37 = scmp.ne.s32.totalorder %s26, %s29
      %p38 = scmp.eq.s32.totalorder %s21, 1
      %p39 = por %p37, %p38
      %p40 = scmp.ne.s32.totalorder %s29, %s30
      %p41 = scmp.eq.s32.totalorder %s21, 0
      %p42 = por %p40, %p41
      %p43 = scmp.ne.s32.totalorder %s29, %s30
      %p44 = scmp.eq.s32.totalorder %s22, 1
      %p45 = por %p43, %p44
      %p47 = scmp.ne.s32.totalorder %s30, %s46
      %p48 = scmp.eq.s32.totalorder %s22, 0
      %p49 = por %p47, %p48
      %s51 = sadd.s32 %s50, 1
      %p54 = scmp.eq.s32.totalorder %s16, 1
      %p55 = scmp.ne.s32.totalorder %s50, %s52
      %p56 = scmp.eq.s32.totalorder %s16, 0
      %p57 = por %p55, %p56
      %p58 = scmp.ne.s32.totalorder %s50, %s52
      %p59 = scmp.eq.s32.totalorder %s21, 1
      %p60 = por %p58, %p59
      %p61 = scmp.ne.s32.totalorder %s52, %s53
      %p62 = scmp.eq.s32.totalorder %s21, 0
      %p63 = por %p61, %p62
      %p64 = scmp.ne.s32.totalorder %s52, %s53
      %p65 = scmp.eq.s32.totalorder %s22, 1
      %p66 = por %p64, %p65
      %p68 = scmp.ne.s32.totalorder %s53, %s67
      %p69 = scmp.eq.s32.totalorder %s22, 0
      %p70 = por %p68, %p69
      %s72 = sadd.s32 %s71, 1
      %p75 = scmp.eq.s32.totalorder %s16, 1
      %p76 = scmp.ne.s32.totalorder %s71, %s73
      %p77 = scmp.eq.s32.totalorder %s16, 0
      %p78 = por %p76, %p77
      %p79 = scmp.ne.s32.totalorder %s71, %s73
      %p80 = scmp.eq.s32.totalorder %s21, 1
      %p81 = por %p79, %p80
      %p82 = scmp.ne.s32.totalorder %s73, %s74
      %p83 = scmp.eq.s32.totalorder %s21, 0
      %p84 = por %p82, %p83
      %p85 = scmp.ne.s32.totalorder %s73, %s74
      %p86 = scmp.eq.s32.totalorder %s22, 1
      %p87 = por %p85, %p86
      %p89 = scmp.ne.s32.totalorder %s74, %s88
      %p90 = scmp.eq.s32.totalorder %s22, 0
      %p91 = por %p89, %p90
      %s92 = ssub.s32 %s16, %s23
      %p93 = scmp.eq.s32.totalorder %s92, 0
      %s95 = sadd.s32 %s94, 1
      %s96 = scalar_select %p93, %s94, %s95
      %p99 = pneg %p93
      %p100 = scmp.eq.s32.totalorder %s16, 1
      %p101 = por %p99, %p100
      %p102 = scmp.ne.s32.totalorder %s94, %s97
      %p103 = scmp.eq.s32.totalorder %s16, 0
      %p104 = por %p102, %p103
      %p105 = scmp.ne.s32.totalorder %s94, %s97
      %p106 = scmp.eq.s32.totalorder %s21, 1
      %p107 = por %p105, %p106
      %p108 = scmp.ne.s32.totalorder %s97, %s98
      %p109 = scmp.eq.s32.totalorder %s21, 0
      %p110 = por %p108, %p109
      %p111 = scmp.ne.s32.totalorder %s97, %s98
      %p112 = scmp.eq.s32.totalorder %s22, 1
      %p113 = por %p111, %p112
      %p115 = scmp.ne.s32.totalorder %s98, %s114
      %p116 = scmp.eq.s32.totalorder %s22, 0
      %p117 = por %p115, %p116
      %p118 = scmp.le.s32.totalorder 1, %s16
      %p119 = scmp.lt.s32.totalorder %s16, 3
      %p120 = pnand %p118, %p119
      %p121 = pneg %p120
      // Predicated region
      $region9: #{tpu_custom_call.1} parent=5 // pred_check
        _
      $region10: #{tpu_custom_call.1} parent=5 // pred_check_branch
        %123 = sbr.rel (%p120) target = $region12
      $region11: #{tpu_custom_call.1} parent=5 // pred_region
        %s124 = ssub.s32 %s16, 1
        // Predicated region
        $region13: #{tpu_custom_call.1} parent=11 // pred_check
          %p125 = pneg %p63
        $region14: #{tpu_custom_call.1} parent=11 // pred_check_branch
          %127 = sbr.rel (%p125) target = $region16
        $region15: #{tpu_custom_call.1} parent=11 // pred_region
          %s129 = ssub.s32 2048, 2048
          %130 = vsyncadd [#allocation6], %s129
          %s131 = sshll.u32 [#allocation5], 4
          %s132 = int_to_ptr.vmem [resolvable:$true] %s131
          %137 = dma.hbm_to_vmem [thread:$0]  %s1, 2048, %s132, [#allocation6], 64, 64, 4
        $region16: #{tpu_custom_call.1} parent=11 // pred_fallthru
          _
        // Predicated region
        $region17: #{tpu_custom_call.1} parent=11 // pred_check
          %p138 = pneg %p84
        $region18: #{tpu_custom_call.1} parent=11 // pred_check_branch
          %140 = sbr.rel (%p138) target = $region20
        $region19: #{tpu_custom_call.1} parent=11 // pred_region
          _
        $region20: #{tpu_custom_call.1} parent=11 // pred_fallthru
          _
      $region12: #{tpu_custom_call.1} parent=5 // pred_fallthru
        _
      %p141 = scmp.lt.s32.totalorder %s16, 2
      // Predicated region
      $region21: #{tpu_custom_call.1} parent=5 // pred_check
        %p142 = pneg %p141
      $region22: #{tpu_custom_call.1} parent=5 // pred_check_branch
        %144 = sbr.rel (%p142) target = $region24
      $region23: #{tpu_custom_call.1} parent=5 // pred_region
        // Predicated region
        $region25: #{tpu_custom_call.1} parent=23 // pred_check
          %p145 = pneg %p36
        $region26: #{tpu_custom_call.1} parent=23 // pred_check_branch
          %147 = sbr.rel (%p145) target = $region28
        $region27: #{tpu_custom_call.1} parent=23 // pred_region
          %s148 = sand.u32 %s26, 1
          %s149 = scalar_lea.sflag [#allocation3], %s148
          %s150 = sand.u32 %s26, 1
          %s151 = smul.addr %s150, 32
          %s152 = scalar_lea.vmem [#allocation2], %s151
          %s153 = smul.u32 2, %s16
          %s154 = ssub.s32 3, %s153
          %p155 = scmp.lt.s32.totalorder %s154, 2
          %s156 = scalar_select %p155, %s154, 2
          %s157 = smul.u32 128, %s156
          %s158 = smul.u32 %s157, 2
          %s160 = ssub.s32 512, %s158
          %161 = vsyncadd %s149, %s160
          %p162 = scmp.ne.s32.totalorder 0, %s158
          %s163 = smul.addr %s153, 2
          %s164 = smul.addr %s163, 128
          %s165 = scalar_lea.hbm %s0, %s164
          %s166 = smul.u32 16, %s156
          %s167 = sshll.u32 %s152, 4
          %s168 = int_to_ptr.vmem [resolvable:$true] %s167
          %s169 = sshll.u32 %s166, 4
          %173 = dma.hbm_to_vmem [thread:$0]  (%p162), %s165, %s169, %s168, %s149, 256, 256, 16
        $region28: #{tpu_custom_call.1} parent=23 // pred_fallthru
          _
      $region24: #{tpu_custom_call.1} parent=5 // pred_fallthru
        _
      %p174 = scmp.le.s32.totalorder 1, %s16
      %p175 = scmp.lt.s32.totalorder %s16, 3
      %p176 = pnand %p174, %p175
      %p177 = pneg %p176
      // Predicated region
      $region29: #{tpu_custom_call.1} parent=5 // pred_check
        _
      $region30: #{tpu_custom_call.1} parent=5 // pred_check_branch
        %179 = sbr.rel (%p176) target = $region32
      $region31: #{tpu_custom_call.1} parent=5 // pred_region
        %s180 = ssub.s32 %s16, 1
        %s181 = sand.u32 %s29, 1
        %s182 = scalar_lea.sflag [#allocation3], %s181
        %s183 = sand.u32 %s29, 1
        %s184 = smul.addr %s183, 32
        %s185 = scalar_lea.vmem [#allocation2], %s184
        // Predicated region
        $region33: #{tpu_custom_call.1} parent=31 // pred_check
          %p186 = pneg %p42
        $region34: #{tpu_custom_call.1} parent=31 // pred_check_branch
          %188 = sbr.rel (%p186) target = $region36
        $region35: #{tpu_custom_call.1} parent=31 // pred_region
          %189 = dma.done %s182, 512
        $region36: #{tpu_custom_call.1} parent=31 // pred_fallthru
          _
        // Predicated region
        $region37: #{tpu_custom_call.1} parent=31 // pred_check
          %p190 = pneg %p63
        $region38: #{tpu_custom_call.1} parent=31 // pred_check_branch
          %192 = sbr.rel (%p190) target = $region40
        $region39: #{tpu_custom_call.1} parent=31 // pred_region
          %193 = dma.done [#allocation6], 2048
        $region40: #{tpu_custom_call.1} parent=31 // pred_fallthru
          _
        %s194 = sand.u32 %s29, 1
        %s195 = scalar_lea.sflag [#allocation3], %s194
        %s196 = sand.u32 %s29, 1
        %s197 = smul.addr %s196, 32
        %s198 = scalar_lea.vmem [#allocation2], %s197
        %p199 = pneg %p42
        %p200 = pneg %p39
        %p201 = pneg %p63
        %p202 = pneg %p60
        %p203 = pneg %p84
        %p204 = pneg %p81
        %p205 = pneg %p110
        %p206 = pneg %p107
        %s207 = sand.u32 %s97, 1
        %s208 = scalar_lea.sflag [#allocation4], %s207
        %s209 = sand.u32 %s97, 1
        %s210 = smul.addr %s209, 16
        %s211 = scalar_lea.vmem [#allocation7], %s210
        %s212 = smul.u32 2, %s21
        %s213 = ssub.s32 3, %s212
        %p214 = scmp.lt.s32.totalorder %s213, 2
        %s215 = scalar_select %p214, %s213, 2
        %s216 = smul.u32 128, %s215
        %s217 = smul.u32 %s216, 2
        %s218 = smul.u32 2, %s21
        %s219 = ssub.s32 3, %s218
        %p220 = scmp.lt.s32.totalorder %s219, 2
        %s221 = scalar_select %p220, %s219, 2
        %s222 = smul.u32 128, %s221
        %v224 = vld [vmem:[%s185] sm:$0xff]
        %v225 = vld [vmem:[%s185 + $0x8] sm:$0xff]
        %v226 = vld [vmem:[%s185 + $0x10] sm:$0xff]
        %v227 = vld [vmem:[%s185 + $0x18] sm:$0xff]
        %v228 = vpack.c.bf16 %v226, %v224
        %v229 = vpack.c.bf16 %v227, %v225
        %v230 = vld [vmem:[#allocation5] sm:$0xf]
        %v231 = vld [vmem:[#allocation5 + $0x4] sm:$0xf]
        %v232 = vld [vmem:[#allocation5 + $0x8] sm:$0xf]
        %v233 = vld [vmem:[#allocation5 + $0xc] sm:$0xf]
        %v234 = vld [vmem:[#allocation5 + $0x10] sm:$0xf]
        %v235 = vld [vmem:[#allocation5 + $0x14] sm:$0xf]
        %v236 = vld [vmem:[#allocation5 + $0x18] sm:$0xf]
        %v237 = vld [vmem:[#allocation5 + $0x1c] sm:$0xf]
        %v238 = vld [vmem:[#allocation5 + $0x20] sm:$0xf]
        %v239 = vld [vmem:[#allocation5 + $0x24] sm:$0xf]
        %v240 = vld [vmem:[#allocation5 + $0x28] sm:$0xf]
        %v241 = vld [vmem:[#allocation5 + $0x2c] sm:$0xf]
        %v242 = vld [vmem:[#allocation5 + $0x30] sm:$0xf]
        %v243 = vld [vmem:[#allocation5 + $0x34] sm:$0xf]
        %v244 = vld [vmem:[#allocation5 + $0x38] sm:$0xf]
        %v245 = vld [vmem:[#allocation5 + $0x3c] sm:$0xf]
        %v246 = vld [vmem:[#allocation5 + $0x40] sm:$0xf]
        %v247 = vld [vmem:[#allocation5 + $0x44] sm:$0xf]
        %v248 = vld [vmem:[#allocation5 + $0x48] sm:$0xf]
        %v249 = vld [vmem:[#allocation5 + $0x4c] sm:$0xf]
        %v250 = vld [vmem:[#allocation5 + $0x50] sm:$0xf]
        %v251 = vld [vmem:[#allocation5 + $0x54] sm:$0xf]
        %v252 = vld [vmem:[#allocation5 + $0x58] sm:$0xf]
        %v253 = vld [vmem:[#allocation5 + $0x5c] sm:$0xf]
        %v254 = vld [vmem:[#allocation5 + $0x60] sm:$0xf]
        %v255 = vld [vmem:[#allocation5 + $0x64] sm:$0xf]
        %v256 = vld [vmem:[#allocation5 + $0x68] sm:$0xf]
        %v257 = vld [vmem:[#allocation5 + $0x6c] sm:$0xf]
        %v258 = vld [vmem:[#allocation5 + $0x70] sm:$0xf]
        %v259 = vld [vmem:[#allocation5 + $0x74] sm:$0xf]
        %v260 = vld [vmem:[#allocation5 + $0x78] sm:$0xf]
        %v261 = vld [vmem:[#allocation5 + $0x7c] sm:$0xf]
        %v262 = vld [vmem:[%s2] sm:$0x7]
        %v263 = vlaneseq
        %v264 = vshrl.u32 %v263, 7
        %v265 = vsub.s32 0, %v264
        %v266 = vrot.slane %v262, %v265
        %v299 = vunpack.c.l.b16 %v230
        %v300 = vunpack.c.l.b16 %v231
        %v301 = vunpack.c.l.b16 %v232
        %v302 = vunpack.c.l.b16 %v233
        %v303 = vunpack.c.l.b16 %v234
        %v304 = vunpack.c.l.b16 %v235
        %v305 = vunpack.c.l.b16 %v236
        %v306 = vunpack.c.l.b16 %v237
        %v307 = vunpack.c.l.b16 %v238
        %v308 = vunpack.c.l.b16 %v239
        %v309 = vunpack.c.l.b16 %v240
        %v310 = vunpack.c.l.b16 %v241
        %v311 = vunpack.c.l.b16 %v242
        %v312 = vunpack.c.l.b16 %v243
        %v313 = vunpack.c.l.b16 %v244
        %v314 = vunpack.c.l.b16 %v245
        %v315 = vunpack.c.l.b16 %v246
        %v316 = vunpack.c.l.b16 %v247
        %v317 = vunpack.c.l.b16 %v248
        %v318 = vunpack.c.l.b16 %v249
        %v319 = vunpack.c.l.b16 %v250
        %v320 = vunpack.c.l.b16 %v251
        %v321 = vunpack.c.l.b16 %v252
        %v322 = vunpack.c.l.b16 %v253
        %v323 = vunpack.c.l.b16 %v254
        %v324 = vunpack.c.l.b16 %v255
        %v325 = vunpack.c.l.b16 %v256
        %v326 = vunpack.c.l.b16 %v257
        %v327 = vunpack.c.l.b16 %v258
        %v328 = vunpack.c.l.b16 %v259
        %v329 = vunpack.c.l.b16 %v260
        %v330 = vunpack.c.l.b16 %v261
        %v331 = vpack.c.b16 %v300, %v299
        %v332 = vpack.c.b16 %v302, %v301
        %v333 = vpack.c.b16 %v304, %v303
        %v334 = vpack.c.b16 %v306, %v305
        %v335 = vpack.c.b16 %v308, %v307
        %v336 = vpack.c.b16 %v310, %v309
        %v337 = vpack.c.b16 %v312, %v311
        %v338 = vpack.c.b16 %v314, %v313
        %v339 = vpack.c.b16 %v316, %v315
        %v340 = vpack.c.b16 %v318, %v317
        %v341 = vpack.c.b16 %v320, %v319
        %v342 = vpack.c.b16 %v322, %v321
        %v343 = vpack.c.b16 %v324, %v323
        %v344 = vpack.c.b16 %v326, %v325
        %v345 = vpack.c.b16 %v328, %v327
        %v346 = vpack.c.b16 %v330, %v329
        %363 = vmatprep.subr.bf16.mxu0 0
        %364 = vmatpush1.bf16.msra.mxu0 %v331
        %365 = vmatprep.subr.bf16.mxu0 0
        %366 = vmatpush1.bf16.msra.mxu0 %v332
        %367 = vmatprep.subr.bf16.mxu0 0
        %368 = vmatpush1.bf16.msra.mxu0 %v333
        %369 = vmatprep.subr.bf16.mxu0 0
        %370 = vmatpush1.bf16.msra.mxu0 %v334
        %371 = vmatprep.subr.bf16.mxu0 0
        %372 = vmatpush1.bf16.msra.mxu0 %v335
        %373 = vmatprep.subr.bf16.mxu0 0
        %374 = vmatpush1.bf16.msra.mxu0 %v336
        %375 = vmatprep.subr.bf16.mxu0 0
        %376 = vmatpush1.bf16.msra.mxu0 %v337
        %377 = vmatprep.subr.bf16.mxu0 0
        %378 = vmatpush1.bf16.msra.mxu0 %v338
        %379 = vmatprep.subr.bf16.mxu0 0
        %380 = vmatpush1.bf16.msra.mxu0 %v339
        %381 = vmatprep.subr.bf16.mxu0 0
        %382 = vmatpush1.bf16.msra.mxu0 %v340
        %383 = vmatprep.subr.bf16.mxu0 0
        %384 = vmatpush1.bf16.msra.mxu0 %v341
        %385 = vmatprep.subr.bf16.mxu0 0
        %386 = vmatpush1.bf16.msra.mxu0 %v342
        %387 = vmatprep.subr.bf16.mxu0 0
        %388 = vmatpush1.bf16.msra.mxu0 %v343
        %389 = vmatprep.subr.bf16.mxu0 0
        %390 = vmatpush1.bf16.msra.mxu0 %v344
        %391 = vmatprep.subr.bf16.mxu0 0
        %392 = vmatpush1.bf16.msra.mxu0 %v345
        %393 = vmatprep.subr.bf16.mxu0 0
        %394 = vmatpush1.bf16.msra.mxu0 %v346
        %395 = vmatprep.mubr.bf16.mxu0 %v229
        %396 = vmatmul.mubr.bf16.gmra.mrb[0].mxu0 %v228
        %v397 = vpop.f32.mrb[0].mxu0
        %v398 = vadd.f32 %v266, %v397
        %v399 = vpop.f32.mrb[0].mxu0
        %v400 = vpop.f32.mrb[0].mxu0
        %v401 = vadd.f32 %v266, %v400
        %v402 = vpop.f32.mrb[0].mxu0
        %403 = vdwg.mxu0
        %404 = vadd.xlane.f32.xlu0 %v398
        %v405 = vpop.xlane.xlu0 %404
        %406 = vadd.xlane.f32.xlu0 %v401
        %v407 = vpop.xlane.xlu0 %406
        %v408 = vrcp.pop 128.0
        %v409 = vmul.f32 %v405, %v408
        %v410 = vmul.f32 %v407, %v408
        %v411 = vsub.f32 %v398, %v409
        %v412 = vsub.f32 %v401, %v410
        %v413 = vmul.f32 %v411, %v411
        %v414 = vmul.f32 %v412, %v412
        %415 = vadd.xlane.f32.xlu0 %v413
        %v416 = vpop.xlane.xlu0 %415
        %417 = vadd.xlane.f32.xlu0 %v414
        %v418 = vpop.xlane.xlu0 %417
        %v419 = vmul.f32 %v416, %v408
        %v420 = vmul.f32 %v418, %v408
        %v421 = vadd.f32 %v419, 1e-12
        %v422 = vadd.f32 %v420, 1e-12
        %v423 = vrsqrt.pop %v421
        %v424 = vrsqrt.pop %v422
        %v425 = vmul.f32 %v411, %v423
        %v426 = vmul.f32 %v412, %v424
        %v427 = vlaneseq
        %v428 = vshrl.u32 %v427, 7
        %v429 = vsub.s32 1, %v428
        %v430 = vrot.slane %v262, %v429
        %v431 = vmul.f32 %v425, %v430
        %v432 = vmul.f32 %v426, %v430
        %v433 = vlaneseq
        %v434 = vshrl.u32 %v433, 7
        %v435 = vsub.s32 2, %v434
        %v436 = vrot.slane %v262, %v435
        %v437 = vadd.f32 %v431, %v436
        %v438 = vadd.f32 %v432, %v436
        %439 = vst [vmem:[%s211] sm:$0xff] %v437
        %440 = vst [vmem:[%s211 + $0x8] sm:$0xff] %v438
        %s441 = sand.u32 %s97, 1
        %s442 = scalar_lea.sflag [#allocation4], %s441
        %s443 = sand.u32 %s97, 1
        %s444 = smul.addr %s443, 16
        %s445 = scalar_lea.vmem [#allocation7], %s444
        // Predicated region
        $region41: #{tpu_custom_call.1} parent=31 // pred_check
          %p446 = pneg %p107
        $region42: #{tpu_custom_call.1} parent=31 // pred_check_branch
          %448 = sbr.rel (%p446) target = $region44
        $region43: #{tpu_custom_call.1} parent=31 // pred_region
          %s449 = smul.u32 2, %s21
          %s450 = ssub.s32 3, %s449
          %p451 = scmp.lt.s32.totalorder %s450, 2
          %s452 = scalar_select %p451, %s450, 2
          %s453 = smul.u32 128, %s452
          %s455 = ssub.s32 256, %s453
          %456 = vsyncadd %s442, %s455
          %p457 = scmp.ne.s32.totalorder 0, %s453
          %s458 = smul.addr %s449, 128
          %s459 = scalar_lea.hbm %s3, %s458
          %s460 = smul.u32 8, %s452
          %s461 = sshll.u32 %s445, 4
          %s462 = int_to_ptr.vmem [resolvable:$true] %s461
          %s463 = sshll.u32 %s460, 4
          %467 = dma.vmem_to_hbm [thread:$0]  (%p457), %s462, %s463, %s459, %s442, 128, 128, 8
        $region44: #{tpu_custom_call.1} parent=31 // pred_fallthru
          _
      $region32: #{tpu_custom_call.1} parent=5 // pred_fallthru
        _
      %p468 = scmp.le.s32.totalorder 2, %s16
      // Predicated region
      $region45: #{tpu_custom_call.1} parent=5 // pred_check
        %p469 = pneg %p468
      $region46: #{tpu_custom_call.1} parent=5 // pred_check_branch
        %471 = sbr.rel (%p469) target = $region48
      $region47: #{tpu_custom_call.1} parent=5 // pred_region
        %s472 = ssub.s32 %s16, 2
        // Predicated region
        $region49: #{tpu_custom_call.1} parent=47 // pred_check
          %p473 = pneg %p113
        $region50: #{tpu_custom_call.1} parent=47 // pred_check_branch
          %475 = sbr.rel (%p473) target = $region52
        $region51: #{tpu_custom_call.1} parent=47 // pred_region
          %s476 = sand.u32 %s98, 1
          %s477 = scalar_lea.sflag [#allocation4], %s476
          %s478 = sand.u32 %s98, 1
          %s479 = smul.addr %s478, 16
          %s480 = scalar_lea.vmem [#allocation7], %s479
          %481 = dma.done %s477, 256
        $region52: #{tpu_custom_call.1} parent=47 // pred_fallthru
          _
      $region48: #{tpu_custom_call.1} parent=5 // pred_fallthru
        _
    $region6: #{tpu_custom_call.1} parent=1 // loop_footer
      %s20 = sadd.s32 1, %s16
    $region7: #{tpu_custom_call.1} parent=1 // loop_footer_branch
      %15 = sbr.rel target = $region3
    $region8: #{tpu_custom_call.1} parent=1 // loop_exit
      _
    %482 = vsyncpa [#allocation3], 1
    %s483 = scalar_lea.sflag [#allocation3], 1
    %484 = vsyncpa %s483, 1
    %485 = vsyncpa [#allocation6], 1
    %486 = vsyncpa [#allocation4], 1
    %s487 = scalar_lea.sflag [#allocation4], 1
    %488 = vsyncpa %s487, 1

// kernel: tpu_custom_call.1
$region0: #{tpu_custom_call.1}
  #allocation0 [shape = 'u32[]', space=smem, size = 0x4, offset = 0x4, fixed_abs, tag = 'smem constant byte address 0x4 - core index']
  #allocation1 [shape = 'u32[144,128]{1,0:T(1,128)}', space=vmem, size = 0x12000, scoped, tag = 'internal scratch']
  %s0 = inlined_call_operand.hbm [shape: f32[18,256], index: 0, kind: input, shape index: {}]
  %s1 = inlined_call_operand.hbm [shape: bf16[256,128], index: 1, kind: input, shape index: {}]
  %s2 = inlined_call_operand.vmem [shape: f32[3,128], index: 2, kind: input, shape index: {}]
  %s3 = inlined_call_operand.hbm [shape: f32[18,128], index: 3, kind: output, shape index: {}]
  %s4 = sld [smem:[#allocation0]]
  $region53: #{tpu_custom_call.1} parent=0
    _
  %s6 = ssub.s32 1, %s4
  %s7 = scalar_select 0, %s6, %s4
  $region1: #{tpu_custom_call.1} parent=0
    #allocation2 [shape = 'u8[32768]{0}', space=vmem, size = 0x8000, scoped, tag = 'input window, operand 0']
    #allocation3 [shape = 's32[2]{0}', space=sflag, size = 0x8, scoped, tag = 'scoped memory for tpu_custom_call.1']
    #allocation4 [shape = 's32[2]{0}', space=sflag, size = 0x8, scoped, tag = 'scoped memory for tpu_custom_call.1']
    #allocation5 [shape = 'u8[65536]{0}', space=vmem, size = 0x10000, scoped, tag = 'input window, operand 1, single buffered']
    #allocation6 [shape = 's32[1]{0}', space=sflag, size = 0x4, scoped, tag = 'scoped memory for tpu_custom_call.1']
    #allocation7 [shape = 'u8[16384]{0}', space=vmem, size = 0x4000, scoped, tag = 'output window, operand 0']
    %8 = vsyncpa [#allocation3], 0
    %s9 = scalar_lea.sflag [#allocation3], 1
    %10 = vsyncpa %s9, 0
    %11 = vsyncpa [#allocation6], 0
    %12 = vsyncpa [#allocation4], 0
    %s13 = scalar_lea.sflag [#allocation4], 1
    %14 = vsyncpa %s13, 0
    loop: start=0, step=1, limit=4
    $region2: #{tpu_custom_call.1} parent=1 // loop_pre_header
      _
    $region3: #{tpu_custom_call.1} parent=1 // loop_header
      %s16 = sphi 0, %s20
      %p17 = scmp.ge.s32.totalorder %s16, 4
      %s26 = sphi 0, %s28
      %s29 = sphi 0, %s26
      %s30 = sphi 0, %s29
      %s46 = sphi 0, %s30
      %s50 = sphi 0, %s50
      %s52 = sphi 0, %s50
      %s53 = sphi 0, %s52
      %s67 = sphi 0, %s53
      %s71 = sphi 0, %s71
      %s73 = sphi 0, %s71
      %s74 = sphi 0, %s73
      %s88 = sphi 0, %s74
      %s94 = sphi 0, %s96
      %s97 = sphi 0, %s94
      %s98 = sphi 0, %s97
      %s114 = sphi 0, %s98
    $region4: #{tpu_custom_call.1} parent=1 // loop_header_branch
      %19 = sbr.rel (%p17) target = $region8
    $region5: #{tpu_custom_call.1} parent=1 // loop_body
      %s21 = ssub.s32 %s16, 1
      %s22 = ssub.s32 %s16, 2
      %s23 = sadd.s32 %s16, 1
      %s24 = ssub.s32 %s16, %s23
      %p25 = scmp.eq.s32.totalorder %s24, 0
      %s27 = sadd.s32 %s26, 1
      %s28 = scalar_select %p25, %s26, %s27
      %p31 = pneg %p25
      %p32 = scmp.eq.s32.totalorder %s16, 1
      %p33 = por %p31, %p32
      %p34 = scmp.ne.s32.totalorder %s26, %s29
      %p35 = scmp.eq.s32.totalorder %s16, 0
      %p36 = por %p34, %p35
      %p37 = scmp.ne.s32.totalorder %s26, %s29
      %p38 = scmp.eq.s32.totalorder %s21, 1
      %p39 = por %p37, %p38
      %p40 = scmp.ne.s32.totalorder %s29, %s30
      %p41 = scmp.eq.s32.totalorder %s21, 0
      %p42 = por %p40, %p41
      %p43 = scmp.ne.s32.totalorder %s29, %s30
      %p44 = scmp.eq.s32.totalorder %s22, 1
      %p45 = por %p43, %p44
      %p47 = scmp.ne.s32.totalorder %s30, %s46
      %p48 = scmp.eq.s32.totalorder %s22, 0
      %p49 = por %p47, %p48
      %s51 = sadd.s32 %s50, 1
      %p54 = scmp.eq.s32.totalorder %s16, 1
      %p55 = scmp.ne.s32.totalorder %s50, %s52
      %p56 = scmp.eq.s32.totalorder %s16, 0
      %p57 = por %p55, %p56
      %p58 = scmp.ne.s32.totalorder %s50, %s52
      %p59 = scmp.eq.s32.totalorder %s21, 1
      %p60 = por %p58, %p59
      %p61 = scmp.ne.s32.totalorder %s52, %s53
      %p62 = scmp.eq.s32.totalorder %s21, 0
      %p63 = por %p61, %p62
      %p64 = scmp.ne.s32.totalorder %s52, %s53
      %p65 = scmp.eq.s32.totalorder %s22, 1
      %p66 = por %p64, %p65
      %p68 = scmp.ne.s32.totalorder %s53, %s67
      %p69 = scmp.eq.s32.totalorder %s22, 0
      %p70 = por %p68, %p69
      %s72 = sadd.s32 %s71, 1
      %p75 = scmp.eq.s32.totalorder %s16, 1
      %p76 = scmp.ne.s32.totalorder %s71, %s73
      %p77 = scmp.eq.s32.totalorder %s16, 0
      %p78 = por %p76, %p77
      %p79 = scmp.ne.s32.totalorder %s71, %s73
      %p80 = scmp.eq.s32.totalorder %s21, 1
      %p81 = por %p79, %p80
      %p82 = scmp.ne.s32.totalorder %s73, %s74
      %p83 = scmp.eq.s32.totalorder %s21, 0
      %p84 = por %p82, %p83
      %p85 = scmp.ne.s32.totalorder %s73, %s74
      %p86 = scmp.eq.s32.totalorder %s22, 1
      %p87 = por %p85, %p86
      %p89 = scmp.ne.s32.totalorder %s74, %s88
      %p90 = scmp.eq.s32.totalorder %s22, 0
      %p91 = por %p89, %p90
      %s92 = ssub.s32 %s16, %s23
      %p93 = scmp.eq.s32.totalorder %s92, 0
      %s95 = sadd.s32 %s94, 1
      %s96 = scalar_select %p93, %s94, %s95
      %p99 = pneg %p93
      %p100 = scmp.eq.s32.totalorder %s16, 1
      %p101 = por %p99, %p100
      %p102 = scmp.ne.s32.totalorder %s94, %s97
      %p103 = scmp.eq.s32.totalorder %s16, 0
      %p104 = por %p102, %p103
      %p105 = scmp.ne.s32.totalorder %s94, %s97
      %p106 = scmp.eq.s32.totalorder %s21, 1
      %p107 = por %p105, %p106
      %p108 = scmp.ne.s32.totalorder %s97, %s98
      %p109 = scmp.eq.s32.totalorder %s21, 0
      %p110 = por %p108, %p109
      %p111 = scmp.ne.s32.totalorder %s97, %s98
      %p112 = scmp.eq.s32.totalorder %s22, 1
      %p113 = por %p111, %p112
      %p115 = scmp.ne.s32.totalorder %s98, %s114
      %p116 = scmp.eq.s32.totalorder %s22, 0
      %p117 = por %p115, %p116
      %p118 = scmp.le.s32.totalorder 1, %s16
      %p119 = scmp.lt.s32.totalorder %s16, 3
      %p120 = pnand %p118, %p119
      %p121 = pneg %p120
      // Predicated region
      $region9: #{tpu_custom_call.1} parent=5 // pred_check
        _
      $region10: #{tpu_custom_call.1} parent=5 // pred_check_branch
        %123 = sbr.rel (%p120) target = $region12
      $region11: #{tpu_custom_call.1} parent=5 // pred_region
        %s124 = ssub.s32 %s16, 1
        // Predicated region
        $region13: #{tpu_custom_call.1} parent=11 // pred_check
          %p125 = pneg %p63
        $region14: #{tpu_custom_call.1} parent=11 // pred_check_branch
          %127 = sbr.rel (%p125) target = $region16
        $region15: #{tpu_custom_call.1} parent=11 // pred_region
          %s129 = ssub.s32 2048, 2048
          %130 = vsyncadd [#allocation6], %s129
          %s131 = sshll.u32 [#allocation5], 4
          %s132 = int_to_ptr.vmem [resolvable:$true] %s131
          %137 = dma.hbm_to_vmem [thread:$0]  %s1, 2048, %s132, [#allocation6], 64, 64, 4
        $region16: #{tpu_custom_call.1} parent=11 // pred_fallthru
          _
        // Predicated region
        $region17: #{tpu_custom_call.1} parent=11 // pred_check
          %p138 = pneg %p84
        $region18: #{tpu_custom_call.1} parent=11 // pred_check_branch
          %140 = sbr.rel (%p138) target = $region20
        $region19: #{tpu_custom_call.1} parent=11 // pred_region
          _
        $region20: #{tpu_custom_call.1} parent=11 // pred_fallthru
          _
      $region12: #{tpu_custom_call.1} parent=5 // pred_fallthru
        _
      %p141 = scmp.lt.s32.totalorder %s16, 2
      // Predicated region
      $region21: #{tpu_custom_call.1} parent=5 // pred_check
        %p142 = pneg %p141
      $region22: #{tpu_custom_call.1} parent=5 // pred_check_branch
        %144 = sbr.rel (%p142) target = $region24
      $region23: #{tpu_custom_call.1} parent=5 // pred_region
        // Predicated region
        $region25: #{tpu_custom_call.1} parent=23 // pred_check
          %p145 = pneg %p36
        $region26: #{tpu_custom_call.1} parent=23 // pred_check_branch
          %147 = sbr.rel (%p145) target = $region28
        $region27: #{tpu_custom_call.1} parent=23 // pred_region
          %s148 = sand.u32 %s26, 1
          %s149 = scalar_lea.sflag [#allocation3], %s148
          %s150 = sand.u32 %s26, 1
          %s151 = smul.addr %s150, 32
          %s152 = scalar_lea.vmem [#allocation2], %s151
          %s153 = smul.u32 2, %s16
          %s154 = ssub.s32 3, %s153
          %p155 = scmp.lt.s32.totalorder %s154, 2
          %s156 = scalar_select %p155, %s154, 2
          %s157 = smul.u32 128, %s156
          %s158 = smul.u32 %s157, 2
          %s160 = ssub.s32 512, %s158
          %161 = vsyncadd %s149, %s160
          %p162 = scmp.ne.s32.totalorder 0, %s158
          %s163 = smul.addr %s153, 2
          %s164 = smul.addr %s163, 128
          %s165 = scalar_lea.hbm %s0, %s164
          %s166 = smul.u32 16, %s156
          %s167 = sshll.u32 %s152, 4
          %s168 = int_to_ptr.vmem [resolvable:$true] %s167
          %s169 = sshll.u32 %s166, 4
          %173 = dma.hbm_to_vmem [thread:$0]  (%p162), %s165, %s169, %s168, %s149, 256, 256, 16
        $region28: #{tpu_custom_call.1} parent=23 // pred_fallthru
          _
      $region24: #{tpu_custom_call.1} parent=5 // pred_fallthru
        _
      %p174 = scmp.le.s32.totalorder 1, %s16
      %p175 = scmp.lt.s32.totalorder %s16, 3
      %p176 = pnand %p174, %p175
      %p177 = pneg %p176
      // Predicated region
      $region29: #{tpu_custom_call.1} parent=5 // pred_check
        _
      $region30: #{tpu_custom_call.1} parent=5 // pred_check_branch
        %179 = sbr.rel (%p176) target = $region32
      $region31: #{tpu_custom_call.1} parent=5 // pred_region
        %s180 = ssub.s32 %s16, 1
        %s181 = sand.u32 %s29, 1
        %s182 = scalar_lea.sflag [#allocation3], %s181
        %s183 = sand.u32 %s29, 1
        %s184 = smul.addr %s183, 32
        %s185 = scalar_lea.vmem [#allocation2], %s184
        // Predicated region
        $region33: #{tpu_custom_call.1} parent=31 // pred_check
          %p186 = pneg %p42
        $region34: #{tpu_custom_call.1} parent=31 // pred_check_branch
          %188 = sbr.rel (%p186) target = $region36
        $region35: #{tpu_custom_call.1} parent=31 // pred_region
          %189 = dma.done %s182, 512
        $region36: #{tpu_custom_call.1} parent=31 // pred_fallthru
          _
        // Predicated region
        $region37: #{tpu_custom_call.1} parent=31 // pred_check
          %p190 = pneg %p63
        $region38: #{tpu_custom_call.1} parent=31 // pred_check_branch
          %192 = sbr.rel (%p190) target = $region40
        $region39: #{tpu_custom_call.1} parent=31 // pred_region
          %193 = dma.done [#allocation6], 2048
        $region40: #{tpu_custom_call.1} parent=31 // pred_fallthru
          _
        %s194 = sand.u32 %s29, 1
        %s195 = scalar_lea.sflag [#allocation3], %s194
        %s196 = sand.u32 %s29, 1
        %s197 = smul.addr %s196, 32
        %s198 = scalar_lea.vmem [#allocation2], %s197
        %p199 = pneg %p42
        %p200 = pneg %p39
        %p201 = pneg %p63
        %p202 = pneg %p60
        %p203 = pneg %p84
        %p204 = pneg %p81
        %p205 = pneg %p110
        %p206 = pneg %p107
        %s207 = sand.u32 %s97, 1
        %s208 = scalar_lea.sflag [#allocation4], %s207
        %s209 = sand.u32 %s97, 1
        %s210 = smul.addr %s209, 16
        %s211 = scalar_lea.vmem [#allocation7], %s210
        %s212 = smul.u32 2, %s21
        %s213 = ssub.s32 3, %s212
        %p214 = scmp.lt.s32.totalorder %s213, 2
        %s215 = scalar_select %p214, %s213, 2
        %s216 = smul.u32 128, %s215
        %s217 = smul.u32 %s216, 2
        %s218 = smul.u32 2, %s21
        %s219 = ssub.s32 3, %s218
        %p220 = scmp.lt.s32.totalorder %s219, 2
        %s221 = scalar_select %p220, %s219, 2
        %s222 = smul.u32 128, %s221
        %v224 = vld [vmem:[%s185] sm:$0xff]
        %v225 = vld [vmem:[%s185 + $0x8] sm:$0xff]
        %v226 = vld [vmem:[%s185 + $0x10] sm:$0xff]
        %v227 = vld [vmem:[%s185 + $0x18] sm:$0xff]
        %v228 = vpack.c.bf16 %v226, %v224
        %v229 = vpack.c.bf16 %v227, %v225
        %v230 = vld [vmem:[#allocation5] sm:$0xf]
        %v231 = vld [vmem:[#allocation5 + $0x4] sm:$0xf]
        %v232 = vld [vmem:[#allocation5 + $0x8] sm:$0xf]
        %v233 = vld [vmem:[#allocation5 + $0xc] sm:$0xf]
        %v234 = vld [vmem:[#allocation5 + $0x10] sm:$0xf]
        %v235 = vld [vmem:[#allocation5 + $0x14] sm:$0xf]
        %v236 = vld [vmem:[#allocation5 + $0x18] sm:$0xf]
        %v237 = vld [vmem:[#allocation5 + $0x1c] sm:$0xf]
        %v238 = vld [vmem:[#allocation5 + $0x20] sm:$0xf]
        %v239 = vld [vmem:[#allocation5 + $0x24] sm:$0xf]
        %v240 = vld [vmem:[#allocation5 + $0x28] sm:$0xf]
        %v241 = vld [vmem:[#allocation5 + $0x2c] sm:$0xf]
        %v242 = vld [vmem:[#allocation5 + $0x30] sm:$0xf]
        %v243 = vld [vmem:[#allocation5 + $0x34] sm:$0xf]
        %v244 = vld [vmem:[#allocation5 + $0x38] sm:$0xf]
        %v245 = vld [vmem:[#allocation5 + $0x3c] sm:$0xf]
        %v246 = vld [vmem:[#allocation5 + $0x40] sm:$0xf]
        %v247 = vld [vmem:[#allocation5 + $0x44] sm:$0xf]
        %v248 = vld [vmem:[#allocation5 + $0x48] sm:$0xf]
        %v249 = vld [vmem:[#allocation5 + $0x4c] sm:$0xf]
        %v250 = vld [vmem:[#allocation5 + $0x50] sm:$0xf]
        %v251 = vld [vmem:[#allocation5 + $0x54] sm:$0xf]
        %v252 = vld [vmem:[#allocation5 + $0x58] sm:$0xf]
        %v253 = vld [vmem:[#allocation5 + $0x5c] sm:$0xf]
        %v254 = vld [vmem:[#allocation5 + $0x60] sm:$0xf]
        %v255 = vld [vmem:[#allocation5 + $0x64] sm:$0xf]
        %v256 = vld [vmem:[#allocation5 + $0x68] sm:$0xf]
        %v257 = vld [vmem:[#allocation5 + $0x6c] sm:$0xf]
        %v258 = vld [vmem:[#allocation5 + $0x70] sm:$0xf]
        %v259 = vld [vmem:[#allocation5 + $0x74] sm:$0xf]
        %v260 = vld [vmem:[#allocation5 + $0x78] sm:$0xf]
        %v261 = vld [vmem:[#allocation5 + $0x7c] sm:$0xf]
        %v262 = vld [vmem:[%s2] sm:$0x7]
        %v263 = vlaneseq
        %v264 = vshrl.u32 %v263, 7
        %v265 = vsub.s32 0, %v264
        %v266 = vrot.slane %v262, %v265
        %v299 = vunpack.c.l.b16 %v230
        %v300 = vunpack.c.l.b16 %v231
        %v301 = vunpack.c.l.b16 %v232
        %v302 = vunpack.c.l.b16 %v233
        %v303 = vunpack.c.l.b16 %v234
        %v304 = vunpack.c.l.b16 %v235
        %v305 = vunpack.c.l.b16 %v236
        %v306 = vunpack.c.l.b16 %v237
        %v307 = vunpack.c.l.b16 %v238
        %v308 = vunpack.c.l.b16 %v239
        %v309 = vunpack.c.l.b16 %v240
        %v310 = vunpack.c.l.b16 %v241
        %v311 = vunpack.c.l.b16 %v242
        %v312 = vunpack.c.l.b16 %v243
        %v313 = vunpack.c.l.b16 %v244
        %v314 = vunpack.c.l.b16 %v245
        %v315 = vunpack.c.l.b16 %v246
        %v316 = vunpack.c.l.b16 %v247
        %v317 = vunpack.c.l.b16 %v248
        %v318 = vunpack.c.l.b16 %v249
        %v319 = vunpack.c.l.b16 %v250
        %v320 = vunpack.c.l.b16 %v251
        %v321 = vunpack.c.l.b16 %v252
        %v322 = vunpack.c.l.b16 %v253
        %v323 = vunpack.c.l.b16 %v254
        %v324 = vunpack.c.l.b16 %v255
        %v325 = vunpack.c.l.b16 %v256
        %v326 = vunpack.c.l.b16 %v257
        %v327 = vunpack.c.l.b16 %v258
        %v328 = vunpack.c.l.b16 %v259
        %v329 = vunpack.c.l.b16 %v260
        %v330 = vunpack.c.l.b16 %v261
        %v331 = vpack.c.b16 %v300, %v299
        %v332 = vpack.c.b16 %v302, %v301
        %v333 = vpack.c.b16 %v304, %v303
        %v334 = vpack.c.b16 %v306, %v305
        %v335 = vpack.c.b16 %v308, %v307
        %v336 = vpack.c.b16 %v310, %v309
        %v337 = vpack.c.b16 %v312, %v311
        %v338 = vpack.c.b16 %v314, %v313
        %v339 = vpack.c.b16 %v316, %v315
        %v340 = vpack.c.b16 %v318, %v317
        %v341 = vpack.c.b16 %v320, %v319
        %v342 = vpack.c.b16 %v322, %v321
        %v343 = vpack.c.b16 %v324, %v323
        %v344 = vpack.c.b16 %v326, %v325
        %v345 = vpack.c.b16 %v328, %v327
        %v346 = vpack.c.b16 %v330, %v329
        %363 = vmatprep.subr.bf16.mxu0 0
        %364 = vmatpush1.bf16.msra.mxu0 %v331
        %365 = vmatprep.subr.bf16.mxu0 0
        %366 = vmatpush1.bf16.msra.mxu0 %v332
        %367 = vmatprep.subr.bf16.mxu0 0
        %368 = vmatpush1.bf16.msra.mxu0 %v333
        %369 = vmatprep.subr.bf16.mxu0 0
        %370 = vmatpush1.bf16.msra.mxu0 %v334
        %371 = vmatprep.subr.bf16.mxu0 0
        %372 = vmatpush1.bf16.msra.mxu0 %v335
        %373 = vmatprep.subr.bf16.mxu0 0
        %374 = vmatpush1.bf16.msra.mxu0 %v336
        %375 = vmatprep.subr.bf16.mxu0 0
        %376 = vmatpush1.bf16.msra.mxu0 %v337
        %377 = vmatprep.subr.bf16.mxu0 0
        %378 = vmatpush1.bf16.msra.mxu0 %v338
        %379 = vmatprep.subr.bf16.mxu0 0
        %380 = vmatpush1.bf16.msra.mxu0 %v339
        %381 = vmatprep.subr.bf16.mxu0 0
        %382 = vmatpush1.bf16.msra.mxu0 %v340
        %383 = vmatprep.subr.bf16.mxu0 0
        %384 = vmatpush1.bf16.msra.mxu0 %v341
        %385 = vmatprep.subr.bf16.mxu0 0
        %386 = vmatpush1.bf16.msra.mxu0 %v342
        %387 = vmatprep.subr.bf16.mxu0 0
        %388 = vmatpush1.bf16.msra.mxu0 %v343
        %389 = vmatprep.subr.bf16.mxu0 0
        %390 = vmatpush1.bf16.msra.mxu0 %v344
        %391 = vmatprep.subr.bf16.mxu0 0
        %392 = vmatpush1.bf16.msra.mxu0 %v345
        %393 = vmatprep.subr.bf16.mxu0 0
        %394 = vmatpush1.bf16.msra.mxu0 %v346
        %395 = vmatprep.mubr.bf16.mxu0 %v229
        %396 = vmatmul.mubr.bf16.gmra.mrb[0].mxu0 %v228
        %v397 = vpop.f32.mrb[0].mxu0
        %v398 = vadd.f32 %v266, %v397
        %v399 = vpop.f32.mrb[0].mxu0
        %v400 = vpop.f32.mrb[0].mxu0
        %v401 = vadd.f32 %v266, %v400
        %v402 = vpop.f32.mrb[0].mxu0
        %403 = vdwg.mxu0
        %404 = vadd.xlane.f32.xlu0 %v398
        %v405 = vpop.xlane.xlu0 %404
        %406 = vadd.xlane.f32.xlu0 %v401
        %v407 = vpop.xlane.xlu0 %406
        %v408 = vrcp.pop 128.0
        %v409 = vmul.f32 %v405, %v408
        %v410 = vmul.f32 %v407, %v408
        %v411 = vsub.f32 %v398, %v409
        %v412 = vsub.f32 %v401, %v410
        %v413 = vmul.f32 %v411, %v411
        %v414 = vmul.f32 %v412, %v412
        %415 = vadd.xlane.f32.xlu0 %v413
        %v416 = vpop.xlane.xlu0 %415
        %417 = vadd.xlane.f32.xlu0 %v414
        %v418 = vpop.xlane.xlu0 %417
        %v419 = vmul.f32 %v416, %v408
        %v420 = vmul.f32 %v418, %v408
        %v421 = vadd.f32 %v419, 1e-12
        %v422 = vadd.f32 %v420, 1e-12
        %v423 = vrsqrt.pop %v421
        %v424 = vrsqrt.pop %v422
        %v425 = vmul.f32 %v411, %v423
        %v426 = vmul.f32 %v412, %v424
        %v427 = vlaneseq
        %v428 = vshrl.u32 %v427, 7
        %v429 = vsub.s32 1, %v428
        %v430 = vrot.slane %v262, %v429
        %v431 = vmul.f32 %v425, %v430
        %v432 = vmul.f32 %v426, %v430
        %v433 = vlaneseq
        %v434 = vshrl.u32 %v433, 7
        %v435 = vsub.s32 2, %v434
        %v436 = vrot.slane %v262, %v435
        %v437 = vadd.f32 %v431, %v436
        %v438 = vadd.f32 %v432, %v436
        %439 = vst [vmem:[%s211] sm:$0xff] %v437
        %440 = vst [vmem:[%s211 + $0x8] sm:$0xff] %v438
        %s441 = sand.u32 %s97, 1
        %s442 = scalar_lea.sflag [#allocation4], %s441
        %s443 = sand.u32 %s97, 1
        %s444 = smul.addr %s443, 16
        %s445 = scalar_lea.vmem [#allocation7], %s444
        // Predicated region
        $region41: #{tpu_custom_call.1} parent=31 // pred_check
          %p446 = pneg %p107
        $region42: #{tpu_custom_call.1} parent=31 // pred_check_branch
          %448 = sbr.rel (%p446) target = $region44
        $region43: #{tpu_custom_call.1} parent=31 // pred_region
          %s449 = smul.u32 2, %s21
          %s450 = ssub.s32 3, %s449
          %p451 = scmp.lt.s32.totalorder %s450, 2
          %s452 = scalar_select %p451, %s450, 2
          %s453 = smul.u32 128, %s452
          %s455 = ssub.s32 256, %s453
          %456 = vsyncadd %s442, %s455
          %p457 = scmp.ne.s32.totalorder 0, %s453
          %s458 = smul.addr %s449, 128
          %s459 = scalar_lea.hbm %s3, %s458
          %s460 = smul.u32 8, %s452
          %s461 = sshll.u32 %s445, 4
          %s462 = int_to_ptr.vmem [resolvable:$true] %s461
          %s463 = sshll.u32 %s460, 4
          %467 = dma.vmem_to_hbm [thread:$0]  (%p457), %s462, %s463, %s459, %s442, 128, 128, 8
        $region44: #{tpu_custom_call.1} parent=31 // pred_fallthru
          _
      $region32: #{tpu_custom_call.1} parent=5 // pred_fallthru
        _
      %p468 = scmp.le.s32.totalorder 2, %s16
      // Predicated region
      $region45: #{tpu_custom_call.1} parent=5 // pred_check
        %p469 = pneg %p468
      $region46: #{tpu_custom_call.1} parent=5 // pred_check_branch
        %471 = sbr.rel (%p469) target = $region48
      $region47: #{tpu_custom_call.1} parent=5 // pred_region
        %s472 = ssub.s32 %s16, 2
        // Predicated region
        $region49: #{tpu_custom_call.1} parent=47 // pred_check
          %p473 = pneg %p113
        $region50: #{tpu_custom_call.1} parent=47 // pred_check_branch
          %475 = sbr.rel (%p473) target = $region52
        $region51: #{tpu_custom_call.1} parent=47 // pred_region
          %s476 = sand.u32 %s98, 1
          %s477 = scalar_lea.sflag [#allocation4], %s476
          %s478 = sand.u32 %s98, 1
          %s479 = smul.addr %s478, 16
          %s480 = scalar_lea.vmem [#allocation7], %s479
          %481 = dma.done %s477, 256
        $region52: #{tpu_custom_call.1} parent=47 // pred_fallthru
          _
      $region48: #{tpu_custom_call.1} parent=5 // pred_fallthru
        _
    $region6: #{tpu_custom_call.1} parent=1 // loop_footer
      %s20 = sadd.s32 1, %s16
    $region7: #{tpu_custom_call.1} parent=1 // loop_footer_branch
      %15 = sbr.rel target = $region3
    $region8: #{tpu_custom_call.1} parent=1 // loop_exit
      _
    %482 = vsyncpa [#allocation3], 1
    %s483 = scalar_lea.sflag [#allocation3], 1
    %484 = vsyncpa %s483, 1
    %485 = vsyncpa [#allocation6], 1
    %486 = vsyncpa [#allocation4], 1
    %s487 = scalar_lea.sflag [#allocation4], 1
    %488 = vsyncpa %s487, 1

</llo_original>
